<compile_context>
chip_gen: v5e
topology: v5e:2x2
jax: 0.10.0
libtpu: 0.0.40
codegen_flags: <defaults>
</compile_context>

<pallas_src>
import functools

import jax
import jax.numpy as jnp
from jax import lax
from jax.experimental import pallas as pl
from jax.experimental.pallas import tpu as pltpu


def _round_up(n, m):
    return ((n + m - 1) // m) * m


def _exact_gelu(x):
    # nn.GELU() default is the exact (erf) formulation.
    return 0.5 * x * (1.0 + lax.erf(x * jnp.float32(0.7071067811865476)))


def mlp_head_kernel(x_ref, w1_ref, vecs_ref, w2_ref, b2_ref, o_ref, hn_ref):
    """One (batch-tile, out-column-tile) grid step.

    Grid = (num_batch_tiles, num_out_tiles); the out-column axis is inner.
    fc1 + GELU + LayerNorm run once per batch tile (n == 0), caching the
    normalized activations in bf16 VMEM scratch; fc2 streams w2 column tiles.
    """
    n = pl.program_id(1)
    bb = x_ref.shape[0]
    # Two independent half-tiles so fc1 MXU work of one half overlaps the
    # GELU/LayerNorm VPU/EUP chain of the other (LLO interleaves the unroll).
    n_sub = 2 if bb % 16 == 0 else 1
    sub = bb // n_sub

    @pl.when(n == 0)
    def _fc1_gelu_ln():
        w1 = w1_ref[...]
        vecs = vecs_ref[...].astype(jnp.float32)       # (3, H): b1, gamma, beta
        b1 = vecs[0:1, :]
        gamma = vecs[1:2, :]
        beta = vecs[2:3, :]
        inv_h = jnp.float32(1.0 / w1.shape[1])
        for s in range(n_sub):
            rows = pl.ds(s * sub, sub)
            x = x_ref[rows, :].astype(w1.dtype)
            # fc1: bf16 operands -> f32 accumulation on the MXU.
            h = jnp.dot(x, w1, preferred_element_type=jnp.float32) + b1
            # GELU (exact / erf), f32.
            h = _exact_gelu(h)
            # LayerNorm over last dim, eps=1e-5, affine. One-pass moments.
            s1 = jnp.sum(h, axis=-1, keepdims=True)
            s2 = jnp.sum(h * h, axis=-1, keepdims=True)
            mu = s1 * inv_h
            var = jnp.maximum(s2 * inv_h - mu * mu, 0.0)
            hn = (h - mu) * lax.rsqrt(var + 1e-5)
            hn = hn * gamma + beta
            # Dropout(p=0.0) in eval mode == identity (no-op).
            hn_ref[rows, :] = hn.astype(hn_ref.dtype)

    # fc2 for this column tile: (sub, H) @ (H, tn), bf16 -> f32 accumulation.
    w2 = w2_ref[...]
    b2 = b2_ref[...].astype(jnp.float32)
    for s in range(n_sub):
        rows = pl.ds(s * sub, sub)
        out = jnp.dot(hn_ref[rows, :], w2, preferred_element_type=jnp.float32)
        o_ref[rows, :] = (out + b2).astype(o_ref.dtype)


def prepare_mlp_head_params(w1_t, b1, gamma, beta, w2_t, b2):
    """One-time parameter preparation (hoisted out of the per-call path).

    w1_t: (D_in, H) fc1 weight pre-transposed (bf16 recommended)
    b1/gamma/beta: (1, H)          w2_t: (H, O) fc2 weight pre-transposed
    b2: (1, O)
    """
    hidden = w1_t.shape[1]
    out_dim = w2_t.shape[1]
    vecs = jnp.concatenate(
        [b1.reshape(1, hidden), gamma.reshape(1, hidden),
         beta.reshape(1, hidden)], axis=0).astype(jnp.float32)
    # Lane-dense output padding: 128 lanes for tiny heads, 256 to fill the MXU
    # N-dim when fc2 compute matters, multiple of the 512-wide column tile when
    # w2 has to be streamed. Padded columns of w2/b2 are zero and sliced away.
    mult = 128 if out_dim < 256 else 256
    out_p = _round_up(max(out_dim, 1), mult)
    if out_p > 512:
        out_p = _round_up(out_p, 512)
    b2 = b2.reshape(1, out_dim)
    if out_p != out_dim:
        w2_t = jnp.pad(w2_t, ((0, 0), (0, out_p - out_dim)))
        b2 = jnp.pad(b2, ((0, 0), (0, out_p - out_dim)))
    return (w1_t, vecs, w2_t, b2, out_dim)


def _vmem_limit_bytes(footprint):
    cap = 128 * 1024 * 1024
    try:
        cap = int(getattr(pltpu.get_tpu_info(), "vmem_capacity_bytes", cap))
    except Exception:  # pragma: no cover - CPU / interpret fallback
        pass
    limit = max(int(footprint * 13 // 10), 32 * 1024 * 1024)
    return int(min(limit, cap * 7 // 8))   # ~12% headroom below physical VMEM


@functools.partial(
    jax.jit, static_argnames=("out_dim", "block_b", "single_buffer_weights"))
def _mlp_head_impl(x, w1_t, vecs, w2_t, b2, *, out_dim, block_b,
                   single_buffer_weights):
    B, d_in = x.shape
    hidden = w1_t.shape[1]
    out_p = w2_t.shape[1]
    tn = min(out_p, 512)                     # out_p is a multiple of tn

    # Batch tile: multiple of 8 sublanes; ragged last block (no x padding).
    bb = _round_up(min(block_b, _round_up(B, 8)), 8)
    if pl.cdiv(B, bb) < 2 and B >= 16:
        # Guarantee >=2 batch grid steps so "parallel" can shard across the
        # two v7x TensorCores.
        bb = _round_up(pl.cdiv(B, 2), 8)
    grid = (pl.cdiv(B, bb), out_p // tn)

    x_isz = jnp.dtype(x.dtype).itemsize
    w_isz = jnp.dtype(w1_t.dtype).itemsize
    o_isz = x_isz
    wbuf = 1 if single_buffer_weights else 2
    sub = bb // (2 if bb % 16 == 0 else 1)
    footprint = (d_in * hidden * w_isz * wbuf      # w1 (resident)
                 + 8 * hidden * 4 * wbuf           # packed b1/gamma/beta
                 + hidden * tn * w_isz * 2         # w2 column tiles (streamed)
                 + 8 * tn * 4 * 2                  # b2 tiles
                 + bb * d_in * x_isz * 2           # x tiles
                 + bb * tn * o_isz * 2             # out tiles
                 + bb * hidden * 2                 # hn scratch (bf16)
                 + 6 * sub * hidden * 4)           # f32 intermediates headroom

    cost = pl.CostEstimate(
        flops=2 * B * (d_in * hidden + hidden * out_p),
        transcendentals=B * hidden,                # erf in GELU
        bytes_accessed=(B * d_in * x_isz
                        + d_in * hidden * w_isz
                        + grid[0] * hidden * out_p * w_isz
                        + 3 * hidden * 4 + out_p * 4
                        + B * out_p * o_isz),
    )

    # Single-buffer the constant-index operands (they never change across the
    # grid, so default double-buffering just doubles their VMEM footprint).
    weight_mode = (dict(pipeline_mode=pl.Buffered(1))
                   if single_buffer_weights else {})

    out = pl.pallas_call(
        mlp_head_kernel,
        out_shape=jax.ShapeDtypeStruct((B, out_p), x.dtype),
        grid_spec=pltpu.PrefetchScalarGridSpec(
            num_scalar_prefetch=0,
            grid=grid,
            in_specs=[
                pl.BlockSpec((bb, d_in), lambda i, n: (i, 0)),      # x (streamed)
                pl.BlockSpec((d_in, hidden), lambda i, n: (0, 0),
                             **weight_mode),                        # w1 (resident)
                pl.BlockSpec((3, hidden), lambda i, n: (0, 0),
                             **weight_mode),                        # b1/gamma/beta
                pl.BlockSpec((hidden, tn), lambda i, n: (0, n)),    # w2 col tile
                pl.BlockSpec((1, tn), lambda i, n: (0, n)),         # b2 col tile
            ],
            out_specs=pl.BlockSpec((bb, tn), lambda i, n: (i, n)),
            scratch_shapes=[pltpu.VMEM((bb, hidden), jnp.bfloat16)],  # cached hn
        ),
        compiler_params=pltpu.CompilerParams(
            dimension_semantics=("parallel", "arbitrary"),
            vmem_limit_bytes=_vmem_limit_bytes(footprint),
        ),
        cost_estimate=cost,
    )(x, w1_t, vecs, w2_t, b2)

    # Slice away the lane padding of the head dimension.
    return out[:, :out_dim]


def mlp_head(x, params, *, block_b=256):
    """Fused MlpHead forward. `params` from prepare_mlp_head_params.

    x: (B, D_in), f32 or bf16 (bf16 halves the streamed DMA bytes).
    """
    w1_t, vecs, w2_t, b2, out_dim = params
    try:
        return _mlp_head_impl(x, w1_t, vecs, w2_t, b2, out_dim=out_dim,
                              block_b=block_b, single_buffer_weights=True)
    except Exception:
        # Fallback if this JAX/Mosaic build rejects pl.Buffered(1) on a
        # constant-index BlockSpec: identical kernel, default double-buffering.
        return _mlp_head_impl(x, w1_t, vecs, w2_t, b2, out_dim=out_dim,
                              block_b=block_b, single_buffer_weights=False)


def reference(x, w1_t, b1, gamma, beta, w2_t, b2):
    # Mirrors the kernel math (bf16 MXU operands, f32 accumulation / LN).
    h = jnp.dot(x.astype(w1_t.dtype), w1_t,
                preferred_element_type=jnp.float32) + b1
    h = 0.5 * h * (1.0 + lax.erf(h / jnp.sqrt(2.0)))
    mu = jnp.mean(h, axis=-1, keepdims=True)
    var = jnp.maximum(jnp.mean(h * h, axis=-1, keepdims=True) - mu * mu, 0.0)
    hn = (h - mu) * lax.rsqrt(var + 1e-5) * gamma + beta
    return jnp.dot(hn.astype(w2_t.dtype), w2_t,
                   preferred_element_type=jnp.float32) + b2


if __name__ == "__main__":
    # Small shapes consistent with MlpHead(input_dim=32, ratio=2, output_dim=10)
    B, INPUT_DIM, RATIO, OUTPUT_DIM = 8, 32, 2, 10
    HIDDEN_DIM = INPUT_DIM * RATIO

    key = jax.random.PRNGKey(0)
    kx, kw1, kb1, kw2, kb2 = jax.random.split(key, 5)

    x = jax.random.normal(kx, (B, INPUT_DIM), dtype=jnp.float32)

    # fc1: Linear(input_dim, hidden_dim) -> stored transposed (D_in, H), bf16.
    w1_t = (jax.random.normal(kw1, (INPUT_DIM, HIDDEN_DIM), dtype=jnp.float32)
            * 0.05).astype(jnp.bfloat16)
    b1 = jax.random.normal(kb1, (1, HIDDEN_DIM), dtype=jnp.float32) * 0.05

    # LayerNorm(hidden_dim): gamma=1, beta=0 (default init), f32.
    gamma = jnp.ones((1, HIDDEN_DIM), dtype=jnp.float32)
    beta = jnp.zeros((1, HIDDEN_DIM), dtype=jnp.float32)

    # fc2: Linear(hidden_dim, output_dim) -> stored transposed (H, O), bf16.
    w2_t = (jax.random.normal(kw2, (HIDDEN_DIM, OUTPUT_DIM), dtype=jnp.float32)
            * 0.05).astype(jnp.bfloat16)
    b2 = jax.random.normal(kb2, (1, OUTPUT_DIM), dtype=jnp.float32) * 0.05

    # One-time parameter prep (packing + lane padding), then the fused forward.
    params = prepare_mlp_head_params(w1_t, b1, gamma, beta, w2_t, b2)
    out = jax.block_until_ready(mlp_head(x, params))

    ref = reference(x, w1_t, b1, gamma, beta, w2_t, b2)
    assert out.shape == (B, OUTPUT_DIM), out.shape
    assert jnp.allclose(out, ref, atol=2e-3, rtol=2e-3), "mismatch vs reference"

    print("KERNEL_OK")
</pallas_src>

<mosaic_0001>
module attributes {stable_mosaic.version = 11 : i64} {
  func.func @mlp_head_kernel(%arg0: i32, %arg1: i32, %arg2: memref<8x32xf32, #tpu.memory_space<vmem>>, %arg3: memref<32x64xbf16, #tpu.memory_space<vmem>>, %arg4: memref<3x64xf32, #tpu.memory_space<vmem>>, %arg5: memref<64x128xbf16, #tpu.memory_space<vmem>>, %arg6: memref<1x128xf32, #tpu.memory_space<vmem>>, %arg7: memref<8x128xf32, #tpu.memory_space<vmem>>, %arg8: memref<8x64xbf16, #tpu.memory_space<vmem>>) attributes {dimension_semantics = [#tpu.dimension_semantics<parallel>, #tpu.dimension_semantics<arbitrary>], iteration_bounds = array<i64: 1, 1>, scalar_prefetch = 0 : i64, scratch_operands = 1 : i64, tpu.core_type = #tpu.core_type<tc>, window_params = [{transform_indices = @transform_0, window_bounds = array<i64: 8, 32>}, {pipeline_mode = #tpu.pipeline_mode<synchronous>, transform_indices = @transform_1, window_bounds = array<i64: 32, 64>}, {pipeline_mode = #tpu.pipeline_mode<synchronous>, transform_indices = @transform_2, window_bounds = array<i64: 3, 64>}, {transform_indices = @transform_3, window_bounds = array<i64: 64, 128>}, {transform_indices = @transform_4, window_bounds = array<i64: 1, 128>}, {transform_indices = @transform_5, window_bounds = array<i64: 8, 128>}]} {
    %c0_i32 = arith.constant 0 : i32
    %0 = arith.cmpi eq, %arg1, %c0_i32 : i32
    %1 = arith.extui %0 : i1 to i32
    %c0_i32_0 = arith.constant 0 : i32
    %2 = arith.cmpi ne, %1, %c0_i32_0 : i32
    scf.if %2 {
      %c0_8 = arith.constant 0 : index
      %c0_9 = arith.constant 0 : index
      %10 = vector.load %arg3[%c0_8, %c0_9] : memref<32x64xbf16, #tpu.memory_space<vmem>>, vector<32x64xbf16>
      %c0_10 = arith.constant 0 : index
      %c0_11 = arith.constant 0 : index
      %11 = vector.load %arg4[%c0_10, %c0_11] : memref<3x64xf32, #tpu.memory_space<vmem>>, vector<3x64xf32>
      %12 = vector.extract_strided_slice %11 {offsets = [0, 0], sizes = [1, 64], strides = [1, 1]} : vector<3x64xf32> to vector<1x64xf32>
      %13 = vector.extract_strided_slice %11 {offsets = [1, 0], sizes = [1, 64], strides = [1, 1]} : vector<3x64xf32> to vector<1x64xf32>
      %14 = vector.extract_strided_slice %11 {offsets = [2, 0], sizes = [1, 64], strides = [1, 1]} : vector<3x64xf32> to vector<1x64xf32>
      %c0_12 = arith.constant 0 : index
      %c0_13 = arith.constant 0 : index
      %15 = vector.load %arg2[%c0_12, %c0_13] : memref<8x32xf32, #tpu.memory_space<vmem>>, vector<8x32xf32>
      %16 = arith.truncf %15 : vector<8x32xf32> to vector<8x32xbf16>
      %cst_14 = arith.constant dense<0.000000e+00> : vector<8x64xf32>
      %17 = tpu.matmul %16, %10, %cst_14 {dimension_numbers = #tpu.dot_dimension_numbers<[1], [0], [0], [1], [0, 0, 1, 1], [], []>} : vector<8x32xbf16>, vector<32x64xbf16>, vector<8x64xf32> -> vector<8x64xf32>
      %18 = vector.broadcast %12 : vector<1x64xf32> to vector<8x64xf32>
      %19 = arith.addf %17, %18 : vector<8x64xf32>
      %cst_15 = arith.constant 5.000000e-01 : f32
      %20 = vector.broadcast %cst_15 : f32 to vector<8x64xf32>
      %21 = arith.mulf %20, %19 : vector<8x64xf32>
      %cst_16 = arith.constant 0.707106769 : f32
      %22 = vector.broadcast %cst_16 : f32 to vector<8x64xf32>
      %23 = arith.mulf %19, %22 : vector<8x64xf32>
      %24 = math.erf %23 : vector<8x64xf32>
      %cst_17 = arith.constant 1.000000e+00 : f32
      %25 = vector.broadcast %cst_17 : f32 to vector<8x64xf32>
      %26 = arith.addf %25, %24 : vector<8x64xf32>
      %27 = arith.mulf %21, %26 : vector<8x64xf32>
      %cst_18 = arith.constant dense<0.000000e+00> : vector<8xf32>
      %28 = vector.multi_reduction <add>, %27, %cst_18 [1] : vector<8x64xf32> to vector<8xf32>
      %29 = vector.shape_cast %28 : vector<8xf32> to vector<8x1xf32>
      %30 = arith.mulf %27, %27 : vector<8x64xf32>
      %cst_19 = arith.constant dense<0.000000e+00> : vector<8xf32>
      %31 = vector.multi_reduction <add>, %30, %cst_19 [1] : vector<8x64xf32> to vector<8xf32>
      %32 = vector.shape_cast %31 : vector<8xf32> to vector<8x1xf32>
      %cst_20 = arith.constant 1.562500e-02 : f32
      %33 = vector.broadcast %cst_20 : f32 to vector<8x1xf32>
      %34 = arith.mulf %29, %33 : vector<8x1xf32>
      %cst_21 = arith.constant 1.562500e-02 : f32
      %35 = vector.broadcast %cst_21 : f32 to vector<8x1xf32>
      %36 = arith.mulf %32, %35 : vector<8x1xf32>
      %37 = arith.mulf %34, %34 : vector<8x1xf32>
      %38 = arith.subf %36, %37 : vector<8x1xf32>
      %cst_22 = arith.constant 0.000000e+00 : f32
      %39 = vector.broadcast %cst_22 : f32 to vector<8x1xf32>
      %40 = arith.maximumf %38, %39 : vector<8x1xf32>
      %41 = vector.broadcast %34 : vector<8x1xf32> to vector<8x64xf32>
      %42 = arith.subf %27, %41 : vector<8x64xf32>
      %cst_23 = arith.constant 9.99999974E-6 : f32
      %43 = vector.broadcast %cst_23 : f32 to vector<8x1xf32>
      %44 = arith.addf %40, %43 : vector<8x1xf32>
      %45 = math.rsqrt %44 : vector<8x1xf32>
      %46 = vector.broadcast %45 : vector<8x1xf32> to vector<8x64xf32>
      %47 = arith.mulf %42, %46 : vector<8x64xf32>
      %48 = vector.broadcast %13 : vector<1x64xf32> to vector<8x64xf32>
      %49 = arith.mulf %47, %48 : vector<8x64xf32>
      %50 = vector.broadcast %14 : vector<1x64xf32> to vector<8x64xf32>
      %51 = arith.addf %49, %50 : vector<8x64xf32>
      %52 = arith.truncf %51 : vector<8x64xf32> to vector<8x64xbf16>
      %c0_24 = arith.constant 0 : index
      %c0_25 = arith.constant 0 : index
      %53 = vector.load %arg8[%c0_24, %c0_25] : memref<8x64xbf16, #tpu.memory_space<vmem>>, vector<8x64xbf16>
      tpu.vector_store %arg8[%c0_24, %c0_25], %52 {strides = array<i32>} : memref<8x64xbf16, #tpu.memory_space<vmem>>, vector<8x64xbf16>,
    } else {
    }
    %c0 = arith.constant 0 : index
    %c0_1 = arith.constant 0 : index
    %3 = vector.load %arg5[%c0, %c0_1] : memref<64x128xbf16, #tpu.memory_space<vmem>>, vector<64x128xbf16>
    %c0_2 = arith.constant 0 : index
    %c0_3 = arith.constant 0 : index
    %4 = vector.load %arg6[%c0_2, %c0_3] : memref<1x128xf32, #tpu.memory_space<vmem>>, vector<1x128xf32>
    %c0_4 = arith.constant 0 : index
    %c0_5 = arith.constant 0 : index
    %5 = vector.load %arg8[%c0_4, %c0_5] : memref<8x64xbf16, #tpu.memory_space<vmem>>, vector<8x64xbf16>
    %cst = arith.constant dense<0.000000e+00> : vector<8x128xf32>
    %6 = tpu.matmul %5, %3, %cst {dimension_numbers = #tpu.dot_dimension_numbers<[1], [0], [0], [1], [0, 0, 1, 1], [], []>} : vector<8x64xbf16>, vector<64x128xbf16>, vector<8x128xf32> -> vector<8x128xf32>
    %7 = vector.broadcast %4 : vector<1x128xf32> to vector<8x128xf32>
    %8 = arith.addf %6, %7 : vector<8x128xf32>
    %c0_6 = arith.constant 0 : index
    %c0_7 = arith.constant 0 : index
    %9 = vector.load %arg7[%c0_6, %c0_7] : memref<8x128xf32, #tpu.memory_space<vmem>>, vector<8x128xf32>
    tpu.vector_store %arg7[%c0_6, %c0_7], %8 {strides = array<i32>} : memref<8x128xf32, #tpu.memory_space<vmem>>, vector<8x128xf32>,
    return
  }
  func.func @transform_0(%arg0: i32, %arg1: i32) -> (i32, i32) {
    %c0_i32 = arith.constant 0 : i32
    %c0_i32_0 = arith.constant 0 : i32
    return %arg0, %c0_i32 : i32, i32
  }
  func.func @transform_1(%arg0: i32, %arg1: i32) -> (i32, i32) {
    %c0_i32 = arith.constant 0 : i32
    %c0_i32_0 = arith.constant 0 : i32
    %c0_i32_1 = arith.constant 0 : i32
    return %c0_i32, %c0_i32_0 : i32, i32
  }
  func.func @transform_2(%arg0: i32, %arg1: i32) -> (i32, i32) {
    %c0_i32 = arith.constant 0 : i32
    %c0_i32_0 = arith.constant 0 : i32
    %c0_i32_1 = arith.constant 0 : i32
    return %c0_i32, %c0_i32_0 : i32, i32
  }
  func.func @transform_3(%arg0: i32, %arg1: i32) -> (i32, i32) {
    %c0_i32 = arith.constant 0 : i32
    %c0_i32_0 = arith.constant 0 : i32
    return %c0_i32, %arg1 : i32, i32
  }
  func.func @transform_4(%arg0: i32, %arg1: i32) -> (i32, i32) {
    %c0_i32 = arith.constant 0 : i32
    %c0_i32_0 = arith.constant 0 : i32
    return %c0_i32, %arg1 : i32, i32
  }
  func.func @transform_5(%arg0: i32, %arg1: i32) -> (i32, i32) {
    %c0_i32 = arith.constant 0 : i32
    return %arg0, %arg1 : i32, i32
  }
}

module attributes {stable_mosaic.version = 11 : i64} {
  func.func @mlp_head_kernel(%arg0: i32, %arg1: i32, %arg2: memref<8x32xf32, #tpu.memory_space<vmem>>, %arg3: memref<32x64xbf16, #tpu.memory_space<vmem>>, %arg4: memref<3x64xf32, #tpu.memory_space<vmem>>, %arg5: memref<64x128xbf16, #tpu.memory_space<vmem>>, %arg6: memref<1x128xf32, #tpu.memory_space<vmem>>, %arg7: memref<8x128xf32, #tpu.memory_space<vmem>>, %arg8: memref<8x64xbf16, #tpu.memory_space<vmem>>) attributes {dimension_semantics = [#tpu.dimension_semantics<parallel>, #tpu.dimension_semantics<arbitrary>], iteration_bounds = array<i64: 1, 1>, scalar_prefetch = 0 : i64, scratch_operands = 1 : i64, tpu.core_type = #tpu.core_type<tc>, window_params = [{transform_indices = @transform_0, window_bounds = array<i64: 8, 32>}, {pipeline_mode = #tpu.pipeline_mode<synchronous>, transform_indices = @transform_1, window_bounds = array<i64: 32, 64>}, {pipeline_mode = #tpu.pipeline_mode<synchronous>, transform_indices = @transform_2, window_bounds = array<i64: 3, 64>}, {transform_indices = @transform_3, window_bounds = array<i64: 64, 128>}, {transform_indices = @transform_4, window_bounds = array<i64: 1, 128>}, {transform_indices = @transform_5, window_bounds = array<i64: 8, 128>}]} {
    %c0_i32 = arith.constant 0 : i32
    %0 = arith.cmpi eq, %arg1, %c0_i32 : i32
    %1 = arith.extui %0 : i1 to i32
    %c0_i32_0 = arith.constant 0 : i32
    %2 = arith.cmpi ne, %1, %c0_i32_0 : i32
    scf.if %2 {
      %c0_8 = arith.constant 0 : index
      %c0_9 = arith.constant 0 : index
      %10 = vector.load %arg3[%c0_8, %c0_9] : memref<32x64xbf16, #tpu.memory_space<vmem>>, vector<32x64xbf16>
      %c0_10 = arith.constant 0 : index
      %c0_11 = arith.constant 0 : index
      %11 = vector.load %arg4[%c0_10, %c0_11] : memref<3x64xf32, #tpu.memory_space<vmem>>, vector<3x64xf32>
      %12 = vector.extract_strided_slice %11 {offsets = [0, 0], sizes = [1, 64], strides = [1, 1]} : vector<3x64xf32> to vector<1x64xf32>
      %13 = vector.extract_strided_slice %11 {offsets = [1, 0], sizes = [1, 64], strides = [1, 1]} : vector<3x64xf32> to vector<1x64xf32>
      %14 = vector.extract_strided_slice %11 {offsets = [2, 0], sizes = [1, 64], strides = [1, 1]} : vector<3x64xf32> to vector<1x64xf32>
      %c0_12 = arith.constant 0 : index
      %c0_13 = arith.constant 0 : index
      %15 = vector.load %arg2[%c0_12, %c0_13] : memref<8x32xf32, #tpu.memory_space<vmem>>, vector<8x32xf32>
      %16 = arith.truncf %15 : vector<8x32xf32> to vector<8x32xbf16>
      %cst_14 = arith.constant dense<0.000000e+00> : vector<8x64xf32>
      %17 = tpu.matmul %16, %10, %cst_14 {dimension_numbers = #tpu.dot_dimension_numbers<[1], [0], [0], [1], [0, 0, 1, 1], [], []>} : vector<8x32xbf16>, vector<32x64xbf16>, vector<8x64xf32> -> vector<8x64xf32>
      %18 = vector.broadcast %12 : vector<1x64xf32> to vector<8x64xf32>
      %19 = arith.addf %17, %18 : vector<8x64xf32>
      %cst_15 = arith.constant 5.000000e-01 : f32
      %20 = vector.broadcast %cst_15 : f32 to vector<8x64xf32>
      %21 = arith.mulf %20, %19 : vector<8x64xf32>
      %cst_16 = arith.constant 0.707106769 : f32
      %22 = vector.broadcast %cst_16 : f32 to vector<8x64xf32>
      %23 = arith.mulf %19, %22 : vector<8x64xf32>
      %24 = math.erf %23 : vector<8x64xf32>
      %cst_17 = arith.constant 1.000000e+00 : f32
      %25 = vector.broadcast %cst_17 : f32 to vector<8x64xf32>
      %26 = arith.addf %25, %24 : vector<8x64xf32>
      %27 = arith.mulf %21, %26 : vector<8x64xf32>
      %cst_18 = arith.constant dense<0.000000e+00> : vector<8xf32>
      %28 = vector.multi_reduction <add>, %27, %cst_18 [1] : vector<8x64xf32> to vector<8xf32>
      %29 = vector.shape_cast %28 : vector<8xf32> to vector<8x1xf32>
      %30 = arith.mulf %27, %27 : vector<8x64xf32>
      %cst_19 = arith.constant dense<0.000000e+00> : vector<8xf32>
      %31 = vector.multi_reduction <add>, %30, %cst_19 [1] : vector<8x64xf32> to vector<8xf32>
      %32 = vector.shape_cast %31 : vector<8xf32> to vector<8x1xf32>
      %cst_20 = arith.constant 1.562500e-02 : f32
      %33 = vector.broadcast %cst_20 : f32 to vector<8x1xf32>
      %34 = arith.mulf %29, %33 : vector<8x1xf32>
      %cst_21 = arith.constant 1.562500e-02 : f32
      %35 = vector.broadcast %cst_21 : f32 to vector<8x1xf32>
      %36 = arith.mulf %32, %35 : vector<8x1xf32>
      %37 = arith.mulf %34, %34 : vector<8x1xf32>
      %38 = arith.subf %36, %37 : vector<8x1xf32>
      %cst_22 = arith.constant 0.000000e+00 : f32
      %39 = vector.broadcast %cst_22 : f32 to vector<8x1xf32>
      %40 = arith.maximumf %38, %39 : vector<8x1xf32>
      %41 = vector.broadcast %34 : vector<8x1xf32> to vector<8x64xf32>
      %42 = arith.subf %27, %41 : vector<8x64xf32>
      %cst_23 = arith.constant 9.99999974E-6 : f32
      %43 = vector.broadcast %cst_23 : f32 to vector<8x1xf32>
      %44 = arith.addf %40, %43 : vector<8x1xf32>
      %45 = math.rsqrt %44 : vector<8x1xf32>
      %46 = vector.broadcast %45 : vector<8x1xf32> to vector<8x64xf32>
      %47 = arith.mulf %42, %46 : vector<8x64xf32>
      %48 = vector.broadcast %13 : vector<1x64xf32> to vector<8x64xf32>
      %49 = arith.mulf %47, %48 : vector<8x64xf32>
      %50 = vector.broadcast %14 : vector<1x64xf32> to vector<8x64xf32>
      %51 = arith.addf %49, %50 : vector<8x64xf32>
      %52 = arith.truncf %51 : vector<8x64xf32> to vector<8x64xbf16>
      %c0_24 = arith.constant 0 : index
      %c0_25 = arith.constant 0 : index
      %53 = vector.load %arg8[%c0_24, %c0_25] : memref<8x64xbf16, #tpu.memory_space<vmem>>, vector<8x64xbf16>
      tpu.vector_store %arg8[%c0_24, %c0_25], %52 {strides = array<i32>} : memref<8x64xbf16, #tpu.memory_space<vmem>>, vector<8x64xbf16>,
    } else {
    }
    %c0 = arith.constant 0 : index
    %c0_1 = arith.constant 0 : index
    %3 = vector.load %arg5[%c0, %c0_1] : memref<64x128xbf16, #tpu.memory_space<vmem>>, vector<64x128xbf16>
    %c0_2 = arith.constant 0 : index
    %c0_3 = arith.constant 0 : index
    %4 = vector.load %arg6[%c0_2, %c0_3] : memref<1x128xf32, #tpu.memory_space<vmem>>, vector<1x128xf32>
    %c0_4 = arith.constant 0 : index
    %c0_5 = arith.constant 0 : index
    %5 = vector.load %arg8[%c0_4, %c0_5] : memref<8x64xbf16, #tpu.memory_space<vmem>>, vector<8x64xbf16>
    %cst = arith.constant dense<0.000000e+00> : vector<8x128xf32>
    %6 = tpu.matmul %5, %3, %cst {dimension_numbers = #tpu.dot_dimension_numbers<[1], [0], [0], [1], [0, 0, 1, 1], [], []>} : vector<8x64xbf16>, vector<64x128xbf16>, vector<8x128xf32> -> vector<8x128xf32>
    %7 = vector.broadcast %4 : vector<1x128xf32> to vector<8x128xf32>
    %8 = arith.addf %6, %7 : vector<8x128xf32>
    %c0_6 = arith.constant 0 : index
    %c0_7 = arith.constant 0 : index
    %9 = vector.load %arg7[%c0_6, %c0_7] : memref<8x128xf32, #tpu.memory_space<vmem>>, vector<8x128xf32>
    tpu.vector_store %arg7[%c0_6, %c0_7], %8 {strides = array<i32>} : memref<8x128xf32, #tpu.memory_space<vmem>>, vector<8x128xf32>,
    return
  }
  func.func @transform_0(%arg0: i32, %arg1: i32) -> (i32, i32) {
    %c0_i32 = arith.constant 0 : i32
    %c0_i32_0 = arith.constant 0 : i32
    return %arg0, %c0_i32 : i32, i32
  }
  func.func @transform_1(%arg0: i32, %arg1: i32) -> (i32, i32) {
    %c0_i32 = arith.constant 0 : i32
    %c0_i32_0 = arith.constant 0 : i32
    %c0_i32_1 = arith.constant 0 : i32
    return %c0_i32, %c0_i32_0 : i32, i32
  }
  func.func @transform_2(%arg0: i32, %arg1: i32) -> (i32, i32) {
    %c0_i32 = arith.constant 0 : i32
    %c0_i32_0 = arith.constant 0 : i32
    %c0_i32_1 = arith.constant 0 : i32
    return %c0_i32, %c0_i32_0 : i32, i32
  }
  func.func @transform_3(%arg0: i32, %arg1: i32) -> (i32, i32) {
    %c0_i32 = arith.constant 0 : i32
    %c0_i32_0 = arith.constant 0 : i32
    return %c0_i32, %arg1 : i32, i32
  }
  func.func @transform_4(%arg0: i32, %arg1: i32) -> (i32, i32) {
    %c0_i32 = arith.constant 0 : i32
    %c0_i32_0 = arith.constant 0 : i32
    return %c0_i32, %arg1 : i32, i32
  }
  func.func @transform_5(%arg0: i32, %arg1: i32) -> (i32, i32) {
    %c0_i32 = arith.constant 0 : i32
    return %arg0, %arg1 : i32, i32
  }
}

</mosaic_0001>

<llo_original>
// kernel: _mlp_head_impl.1
$region0: #{_mlp_head_impl.1}
  #allocation0 [shape = 'u32[]', space=smem, size = 0x4, offset = 0x4, fixed_abs, tag = 'smem constant byte address 0x4 - core index']
  #allocation1 [shape = 'u32[72,128]{1,0:T(1,128)}', space=vmem, size = 0x9000, scoped, tag = 'internal scratch']
  #allocation2 [shape = 'bf16[8,64]{1,0:T(8,128)(2,1)}', space=vmem, size = 0x800, scoped, tag = 'scratch operand']
  %s0 = inlined_call_operand.hbm [shape: f32[8,32], index: 0, kind: input, shape index: {}]
  %s1 = inlined_call_operand.hbm [shape: bf16[32,64], index: 1, kind: input, shape index: {}]
  %s2 = inlined_call_operand.hbm [shape: f32[3,64], index: 2, kind: input, shape index: {}]
  %s3 = inlined_call_operand.hbm [shape: bf16[64,128], index: 3, kind: input, shape index: {}]
  %s4 = inlined_call_operand.vmem [shape: f32[1,128], index: 4, kind: input, shape index: {}]
  %s5 = inlined_call_operand.hbm [shape: f32[8,128], index: 5, kind: output, shape index: {}]
  %s6 = sld [smem:[#allocation0]]
  $region50: #{_mlp_head_impl.1} parent=0
    _
  %s8 = ssub.s32 1, %s6
  %s9 = scalar_select 0, %s8, %s6
  $region1: #{_mlp_head_impl.1} parent=0
    #allocation3 [shape = 'u8[4096]{0}', space=vmem, size = 0x1000, scoped, tag = 'input window, operand 0, single buffered']
    #allocation4 [shape = 's32[1]{0}', space=sflag, size = 0x4, scoped, tag = 'scoped memory for _mlp_head_impl.1']
    #allocation5 [shape = 's32[1]{0}', space=sflag, size = 0x4, scoped, tag = 'scoped memory for _mlp_head_impl.1']
    #allocation6 [shape = 'u8[8192]{0}', space=vmem, size = 0x2000, scoped, tag = 'input window, operand 1, single buffered']
    #allocation7 [shape = 's32[1]{0}', space=sflag, size = 0x4, scoped, tag = 'scoped memory for _mlp_head_impl.1']
    #allocation8 [shape = 'u8[2048]{0}', space=vmem, size = 0x800, scoped, tag = 'input window, operand 2, single buffered']
    #allocation9 [shape = 'u8[16384]{0}', space=vmem, size = 0x4000, scoped, tag = 'input window, operand 3, single buffered']
    #allocation10 [shape = 's32[1]{0}', space=sflag, size = 0x4, scoped, tag = 'scoped memory for _mlp_head_impl.1']
    #allocation11 [shape = 'u8[4096]{0}', space=vmem, size = 0x1000, scoped, tag = 'output window, operand 0, single buffered']
    %10 = vsyncpa [#allocation4], 0
    %11 = vsyncpa [#allocation7], 0
    %12 = vsyncpa [#allocation10], 0
    %13 = vsyncpa [#allocation5], 0
    // Predicated region
    $region2: #{_mlp_head_impl.1} parent=1 // pred_check
      _
    $region3: #{_mlp_head_impl.1} parent=1 // pred_check_branch
      %15 = sbr.rel (0) target = $region5
    $region4: #{_mlp_head_impl.1} parent=1 // pred_region
      %17 = vsyncadd [#allocation4], 0
      %s19 = sshll.u32 %s0, 4
      %s20 = int_to_ptr.hbm [resolvable:$true] %s19
      %s21 = sshll.u32 [#allocation3], 4
      %s22 = int_to_ptr.vmem [resolvable:$true] %s21
      %24 = dma.hbm_to_vmem [thread:$0]  %s20, 128, %s22, [#allocation4]
    $region5: #{_mlp_head_impl.1} parent=1 // pred_fallthru
      _
    // Predicated region
    $region6: #{_mlp_head_impl.1} parent=1 // pred_check
      _
    $region7: #{_mlp_head_impl.1} parent=1 // pred_check_branch
      %26 = sbr.rel (0) target = $region9
    $region8: #{_mlp_head_impl.1} parent=1 // pred_region
      %28 = vsyncadd [#allocation7], 0
      %s29 = sshll.u32 %s1, 4
      %s30 = int_to_ptr.hbm [resolvable:$true] %s29
      %s31 = sshll.u32 [#allocation6], 4
      %s32 = int_to_ptr.vmem [resolvable:$true] %s31
      %37 = dma.hbm_to_vmem [thread:$0]  %s30, 256, %s32, [#allocation7], 64, 64, 4
    $region9: #{_mlp_head_impl.1} parent=1 // pred_fallthru
      _
    // Predicated region
    $region10: #{_mlp_head_impl.1} parent=1 // pred_check
      _
    $region11: #{_mlp_head_impl.1} parent=1 // pred_check_branch
      %39 = sbr.rel (0) target = $region13
    $region12: #{_mlp_head_impl.1} parent=1 // pred_region
      %41 = vsyncadd [#allocation7], 0
      %s43 = sshll.u32 %s2, 4
      %s44 = int_to_ptr.hbm [resolvable:$true] %s43
      %s45 = sshll.u32 [#allocation8], 4
      %s46 = int_to_ptr.vmem [resolvable:$true] %s45
      %48 = dma.hbm_to_vmem [thread:$0]  %s44, 64, %s46, [#allocation7]
    $region13: #{_mlp_head_impl.1} parent=1 // pred_fallthru
      _
    // Predicated region
    $region14: #{_mlp_head_impl.1} parent=1 // pred_check
      _
    $region15: #{_mlp_head_impl.1} parent=1 // pred_check_branch
      %50 = sbr.rel (0) target = $region17
    $region16: #{_mlp_head_impl.1} parent=1 // pred_region
      %52 = vsyncadd [#allocation10], 0
      %s53 = sshll.u32 %s3, 4
      %s54 = int_to_ptr.hbm [resolvable:$true] %s53
      %s55 = sshll.u32 [#allocation9], 4
      %s56 = int_to_ptr.vmem [resolvable:$true] %s55
      %61 = dma.hbm_to_vmem [thread:$0]  %s54, 512, %s56, [#allocation10], 64, 64, 4
    $region17: #{_mlp_head_impl.1} parent=1 // pred_fallthru
      _
    // Predicated region
    $region18: #{_mlp_head_impl.1} parent=1 // pred_check
      _
    $region19: #{_mlp_head_impl.1} parent=1 // pred_check_branch
      %63 = sbr.rel (0) target = $region21
    $region20: #{_mlp_head_impl.1} parent=1 // pred_region
      _
    $region21: #{_mlp_head_impl.1} parent=1 // pred_fallthru
      _
    // Predicated region
    $region22: #{_mlp_head_impl.1} parent=1 // pred_check
      _
    $region23: #{_mlp_head_impl.1} parent=1 // pred_check_branch
      %65 = sbr.rel (0) target = $region25
    $region24: #{_mlp_head_impl.1} parent=1 // pred_region
      %67 = dma.done [#allocation4], 128
    $region25: #{_mlp_head_impl.1} parent=1 // pred_fallthru
      _
    // Predicated region
    $region26: #{_mlp_head_impl.1} parent=1 // pred_check
      _
    $region27: #{_mlp_head_impl.1} parent=1 // pred_check_branch
      %69 = sbr.rel (0) target = $region29
    $region28: #{_mlp_head_impl.1} parent=1 // pred_region
      %71 = dma.done [#allocation7], 256
    $region29: #{_mlp_head_impl.1} parent=1 // pred_fallthru
      _
    // Predicated region
    $region30: #{_mlp_head_impl.1} parent=1 // pred_check
      _
    $region31: #{_mlp_head_impl.1} parent=1 // pred_check_branch
      %73 = sbr.rel (0) target = $region33
    $region32: #{_mlp_head_impl.1} parent=1 // pred_region
      %75 = dma.done [#allocation7], 64
    $region33: #{_mlp_head_impl.1} parent=1 // pred_fallthru
      _
    // Predicated region
    $region34: #{_mlp_head_impl.1} parent=1 // pred_check
      _
    $region35: #{_mlp_head_impl.1} parent=1 // pred_check_branch
      %77 = sbr.rel (0) target = $region37
    $region36: #{_mlp_head_impl.1} parent=1 // pred_region
      %79 = dma.done [#allocation10], 512
    $region37: #{_mlp_head_impl.1} parent=1 // pred_fallthru
      _
    %p81 = scmp.eq.s32.totalorder 0, 0
    // Predicated region
    $region38: #{_mlp_head_impl.1} parent=1 // pred_check
      %p82 = pneg %p81
    $region39: #{_mlp_head_impl.1} parent=1 // pred_check_branch
      %84 = sbr.rel (%p82) target = $region41
    $region40: #{_mlp_head_impl.1} parent=1 // pred_region
      %v85 = vld [vmem:[#allocation6] sm:$0xf]
      %v86 = vld [vmem:[#allocation6 + $0x4] sm:$0xf]
      %v87 = vld [vmem:[#allocation6 + $0x8] sm:$0xf]
      %v88 = vld [vmem:[#allocation6 + $0xc] sm:$0xf]
      %v89 = vld [vmem:[#allocation8] sm:$0x7]
      %v90 = vld [vmem:[#allocation3] sm:$0xff]
      %v91 = vpack.c.bf16 %v90, %v90
      %v92 = vperm.slane %v89, 0
      %v97 = vunpack.c.l.b16 %v85
      %v98 = vunpack.c.l.b16 %v86
      %v99 = vunpack.c.l.b16 %v87
      %v100 = vunpack.c.l.b16 %v88
      %v101 = vpack.c.b16 %v98, %v97
      %v102 = vpack.c.b16 %v100, %v99
      %vm105 = vcmask 261120
      %v107 = vsel %vm105, %v91, 0
      %109 = vmatpush.bf16.msra.mxu0 0
      %110 = vmatpush.bf16.msra.mxu0 0
      %111 = vmatpush.bf16.msra.mxu0 0
      %112 = vmatpush.bf16.msra.mxu0 0
      %113 = vmatpush.bf16.msra.mxu0 0
      %114 = vmatpush.bf16.msra.mxu0 0
      %115 = vmatpush.bf16.msra.mxu0 %v102
      %116 = vmatpush.bf16.msra.mxu0 %v101
      %117 = vmatmul.bf16.gmra.mxu0 %v107
      %v118 = vpop.f32.mrf.mxu0
      %v119 = vadd.f32 %v92, %v118
      %v120 = vpop.f32.mrf.mxu0
      %121 = vdwg.mxu0
      %v122 = vmul.f32 %v119, 0.5
      %v123 = vmul.f32 %v119, 0.70710677
      %v124 = vmul.f32 %v123, %v123
      %v125 = vmin.f32 16.0, %v124
      %v126 = vmul.f32 %v125, 2.1237322e-06
      %v127 = vadd.f32 %v126, 0.00028619796
      %v128 = vmul.f32 %v125, %v127
      %v129 = vadd.f32 %v128, 0.0036580483
      %v130 = vmul.f32 %v125, %v129
      %v131 = vadd.f32 %v130, 0.05243302
      %v132 = vmul.f32 %v125, %v131
      %v133 = vadd.f32 %v132, 0.18741608
      %v134 = vmul.f32 %v125, %v133
      %v135 = vadd.f32 %v134, 1.1283791
      %v136 = vmul.f32 %v123, %v135
      %v137 = vmul.f32 %v125, 3.8918573e-05
      %v138 = vadd.f32 %v137, 0.001143296
      %v139 = vmul.f32 %v125, %v138
      %v140 = vadd.f32 %v139, 0.014752088
      %v141 = vmul.f32 %v125, %v140
      %v142 = vadd.f32 %v141, 0.112945676
      %v143 = vmul.f32 %v125, %v142
      %v144 = vadd.f32 %v143, 0.4994258
      %v145 = vmul.f32 %v125, %v144
      %v146 = vadd.f32 %v145, 1.0
      %v147 = vrcp.pop %v146
      %v148 = vmul.f32 %v146, %v147
      %v149 = vsub.f32 1.0, %v148
      %v150 = vmul.f32 %v147, %v149
      %v151 = vadd.f32 %v147, %v150
      %vm152 = vweird.f32 %v146
      %vm153 = vweird.f32 %v147
      %vm154 = vmor %vm152, %vm153
      %v155 = vsel %vm154, %v147, %v151
      %v156 = vand.u32 2147483647, %v146
      %vm157 = vcmp.eq.f32.partialorder %v156, 8.507059e+37
      %v158 = vand.u32 %v146, 2147483648
      %v159 = vor.u32 1.1754944e-38, %v158
      %v160 = vsel %vm157, %v159, %v155
      %v161 = vmul.f32 %v136, %v160
      %v162 = vmin.f32 %v161, 1.0
      %v163 = vmax.f32 %v162, -1.0
      %v164 = vadd.f32 %v163, 1.0
      %v165 = vmul.f32 %v122, %v164
      %vm166 = vcmask 523264
      %v167 = vsel %vm166, %v165, 0.0
      %168 = vadd.xlane.f32.xlu0 %v167
      %v169 = vpop.xlane.xlu0 %168
      %v170 = vmul.f32 %v165, %v165
      %v171 = vsel %vm166, %v170, 0.0
      %172 = vadd.xlane.f32.xlu0 %v171
      %v173 = vpop.xlane.xlu0 %172
      %v174 = vmul.f32 %v169, 0.015625
      %v175 = vmul.f32 %v173, 0.015625
      %v176 = vmul.f32 %v174, %v174
      %v177 = vsub.f32 %v175, %v176
      %v178 = vmax.f32 %v177, 0.0
      %v179 = vsub.f32 %v165, %v174
      %v180 = vadd.f32 %v178, 1e-05
      %v181 = vrsqrt.pop %v180
      %v182 = vmul.f32 %v181, %v180
      %v183 = vmul.f32 %v182, %v181
      %v184 = vmul.f32 0.5, %v183
      %v185 = vsub.f32 1.5, %v184
      %v186 = vmul.f32 %v181, %v185
      %vm187 = vweird.f32 %v180
      %vm188 = vweird.f32 %v181
      %vm189 = vmor %vm187, %vm188
      %v190 = vsel %vm189, %v181, %v186
      %v191 = vmul.f32 %v179, %v190
      %v192 = vperm.slane %v89, 1
      %v193 = vmul.f32 %v191, %v192
      %v194 = vperm.slane %v89, 2
      %v195 = vadd.f32 %v193, %v194
      %v196 = vpack.c.bf16 %v195, %v195
      %vm197 = vcmask 519168
      %198 = vst.msk [vmem:[#allocation2] sm:$0xf] %vm197, %v196
    $region41: #{_mlp_head_impl.1} parent=1 // pred_fallthru
      _
    %v199 = vld [vmem:[#allocation9] sm:$0xf]
    %v200 = vld [vmem:[#allocation9 + $0x4] sm:$0xf]
    %v201 = vld [vmem:[#allocation9 + $0x8] sm:$0xf]
    %v202 = vld [vmem:[#allocation9 + $0xc] sm:$0xf]
    %v203 = vld [vmem:[#allocation9 + $0x10] sm:$0xf]
    %v204 = vld [vmem:[#allocation9 + $0x14] sm:$0xf]
    %v205 = vld [vmem:[#allocation9 + $0x18] sm:$0xf]
    %v206 = vld [vmem:[#allocation9 + $0x1c] sm:$0xf]
    %v207 = vld [vmem:[%s4] sm:$0x1]
    %v208 = vld [vmem:[#allocation2] sm:$0xf]
    %v210 = vperm.slane %v207, 0
    %v220 = vunpack.c.l.b16 %v199
    %v221 = vunpack.c.l.b16 %v200
    %v222 = vunpack.c.l.b16 %v201
    %v223 = vunpack.c.l.b16 %v202
    %v224 = vunpack.c.l.b16 %v203
    %v225 = vunpack.c.l.b16 %v204
    %v226 = vunpack.c.l.b16 %v205
    %v227 = vunpack.c.l.b16 %v206
    %v228 = vpack.c.b16 %v221, %v220
    %v229 = vpack.c.b16 %v223, %v222
    %v230 = vpack.c.b16 %v225, %v224
    %v231 = vpack.c.b16 %v227, %v226
    %vm236 = vcmask 523264
    %v238 = vsel %vm236, %v208, 0
    %240 = vmatpush.bf16.msra.mxu0 0
    %241 = vmatpush.bf16.msra.mxu0 0
    %242 = vmatpush.bf16.msra.mxu0 0
    %243 = vmatpush.bf16.msra.mxu0 0
    %244 = vmatpush.bf16.msra.mxu0 %v231
    %245 = vmatpush.bf16.msra.mxu0 %v230
    %246 = vmatpush.bf16.msra.mxu0 %v229
    %247 = vmatpush.bf16.msra.mxu0 %v228
    %248 = vmatmul.bf16.gmra.mxu0 %v238
    %v249 = vpop.f32.mrf.mxu0
    %v250 = vadd.f32 %v210, %v249
    %v251 = vpop.f32.mrf.mxu0
    %252 = vdwg.mxu0
    %253 = vst [vmem:[#allocation11] sm:$0xff] %v250
    // Predicated region
    $region42: #{_mlp_head_impl.1} parent=1 // pred_check
      _
    $region43: #{_mlp_head_impl.1} parent=1 // pred_check_branch
      %255 = sbr.rel (0) target = $region45
    $region44: #{_mlp_head_impl.1} parent=1 // pred_region
      %257 = vsyncadd [#allocation5], 0
      %s259 = sshll.u32 [#allocation11], 4
      %s260 = int_to_ptr.vmem [resolvable:$true] %s259
      %s261 = sshll.u32 %s5, 4
      %s262 = int_to_ptr.hbm [resolvable:$true] %s261
      %264 = dma.vmem_to_hbm [thread:$0]  %s260, 128, %s262, [#allocation5]
    $region45: #{_mlp_head_impl.1} parent=1 // pred_fallthru
      _
    // Predicated region
    $region46: #{_mlp_head_impl.1} parent=1 // pred_check
      _
    $region47: #{_mlp_head_impl.1} parent=1 // pred_check_branch
      %266 = sbr.rel (0) target = $region49
    $region48: #{_mlp_head_impl.1} parent=1 // pred_region
      %268 = dma.done [#allocation5], 128
    $region49: #{_mlp_head_impl.1} parent=1 // pred_fallthru
      _
    %269 = vsyncpa [#allocation4], 1
    %270 = vsyncpa [#allocation7], 1
    %271 = vsyncpa [#allocation10], 1
    %272 = vsyncpa [#allocation5], 1

// kernel: _mlp_head_impl.1
$region0: #{_mlp_head_impl.1}
  #allocation0 [shape = 'u32[]', space=smem, size = 0x4, offset = 0x4, fixed_abs, tag = 'smem constant byte address 0x4 - core index']
  #allocation1 [shape = 'u32[72,128]{1,0:T(1,128)}', space=vmem, size = 0x9000, scoped, tag = 'internal scratch']
  #allocation2 [shape = 'bf16[8,64]{1,0:T(8,128)(2,1)}', space=vmem, size = 0x800, scoped, tag = 'scratch operand']
  %s0 = inlined_call_operand.hbm [shape: f32[8,32], index: 0, kind: input, shape index: {}]
  %s1 = inlined_call_operand.hbm [shape: bf16[32,64], index: 1, kind: input, shape index: {}]
  %s2 = inlined_call_operand.hbm [shape: f32[3,64], index: 2, kind: input, shape index: {}]
  %s3 = inlined_call_operand.hbm [shape: bf16[64,128], index: 3, kind: input, shape index: {}]
  %s4 = inlined_call_operand.vmem [shape: f32[1,128], index: 4, kind: input, shape index: {}]
  %s5 = inlined_call_operand.hbm [shape: f32[8,128], index: 5, kind: output, shape index: {}]
  %s6 = sld [smem:[#allocation0]]
  $region50: #{_mlp_head_impl.1} parent=0
    _
  %s8 = ssub.s32 1, %s6
  %s9 = scalar_select 0, %s8, %s6
  $region1: #{_mlp_head_impl.1} parent=0
    #allocation3 [shape = 'u8[4096]{0}', space=vmem, size = 0x1000, scoped, tag = 'input window, operand 0, single buffered']
    #allocation4 [shape = 's32[1]{0}', space=sflag, size = 0x4, scoped, tag = 'scoped memory for _mlp_head_impl.1']
    #allocation5 [shape = 's32[1]{0}', space=sflag, size = 0x4, scoped, tag = 'scoped memory for _mlp_head_impl.1']
    #allocation6 [shape = 'u8[8192]{0}', space=vmem, size = 0x2000, scoped, tag = 'input window, operand 1, single buffered']
    #allocation7 [shape = 's32[1]{0}', space=sflag, size = 0x4, scoped, tag = 'scoped memory for _mlp_head_impl.1']
    #allocation8 [shape = 'u8[2048]{0}', space=vmem, size = 0x800, scoped, tag = 'input window, operand 2, single buffered']
    #allocation9 [shape = 'u8[16384]{0}', space=vmem, size = 0x4000, scoped, tag = 'input window, operand 3, single buffered']
    #allocation10 [shape = 's32[1]{0}', space=sflag, size = 0x4, scoped, tag = 'scoped memory for _mlp_head_impl.1']
    #allocation11 [shape = 'u8[4096]{0}', space=vmem, size = 0x1000, scoped, tag = 'output window, operand 0, single buffered']
    %10 = vsyncpa [#allocation4], 0
    %11 = vsyncpa [#allocation7], 0
    %12 = vsyncpa [#allocation10], 0
    %13 = vsyncpa [#allocation5], 0
    // Predicated region
    $region2: #{_mlp_head_impl.1} parent=1 // pred_check
      _
    $region3: #{_mlp_head_impl.1} parent=1 // pred_check_branch
      %15 = sbr.rel (0) target = $region5
    $region4: #{_mlp_head_impl.1} parent=1 // pred_region
      %17 = vsyncadd [#allocation4], 0
      %s19 = sshll.u32 %s0, 4
      %s20 = int_to_ptr.hbm [resolvable:$true] %s19
      %s21 = sshll.u32 [#allocation3], 4
      %s22 = int_to_ptr.vmem [resolvable:$true] %s21
      %24 = dma.hbm_to_vmem [thread:$0]  %s20, 128, %s22, [#allocation4]
    $region5: #{_mlp_head_impl.1} parent=1 // pred_fallthru
      _
    // Predicated region
    $region6: #{_mlp_head_impl.1} parent=1 // pred_check
      _
    $region7: #{_mlp_head_impl.1} parent=1 // pred_check_branch
      %26 = sbr.rel (0) target = $region9
    $region8: #{_mlp_head_impl.1} parent=1 // pred_region
      %28 = vsyncadd [#allocation7], 0
      %s29 = sshll.u32 %s1, 4
      %s30 = int_to_ptr.hbm [resolvable:$true] %s29
      %s31 = sshll.u32 [#allocation6], 4
      %s32 = int_to_ptr.vmem [resolvable:$true] %s31
      %37 = dma.hbm_to_vmem [thread:$0]  %s30, 256, %s32, [#allocation7], 64, 64, 4
    $region9: #{_mlp_head_impl.1} parent=1 // pred_fallthru
      _
    // Predicated region
    $region10: #{_mlp_head_impl.1} parent=1 // pred_check
      _
    $region11: #{_mlp_head_impl.1} parent=1 // pred_check_branch
      %39 = sbr.rel (0) target = $region13
    $region12: #{_mlp_head_impl.1} parent=1 // pred_region
      %41 = vsyncadd [#allocation7], 0
      %s43 = sshll.u32 %s2, 4
      %s44 = int_to_ptr.hbm [resolvable:$true] %s43
      %s45 = sshll.u32 [#allocation8], 4
      %s46 = int_to_ptr.vmem [resolvable:$true] %s45
      %48 = dma.hbm_to_vmem [thread:$0]  %s44, 64, %s46, [#allocation7]
    $region13: #{_mlp_head_impl.1} parent=1 // pred_fallthru
      _
    // Predicated region
    $region14: #{_mlp_head_impl.1} parent=1 // pred_check
      _
    $region15: #{_mlp_head_impl.1} parent=1 // pred_check_branch
      %50 = sbr.rel (0) target = $region17
    $region16: #{_mlp_head_impl.1} parent=1 // pred_region
      %52 = vsyncadd [#allocation10], 0
      %s53 = sshll.u32 %s3, 4
      %s54 = int_to_ptr.hbm [resolvable:$true] %s53
      %s55 = sshll.u32 [#allocation9], 4
      %s56 = int_to_ptr.vmem [resolvable:$true] %s55
      %61 = dma.hbm_to_vmem [thread:$0]  %s54, 512, %s56, [#allocation10], 64, 64, 4
    $region17: #{_mlp_head_impl.1} parent=1 // pred_fallthru
      _
    // Predicated region
    $region18: #{_mlp_head_impl.1} parent=1 // pred_check
      _
    $region19: #{_mlp_head_impl.1} parent=1 // pred_check_branch
      %63 = sbr.rel (0) target = $region21
    $region20: #{_mlp_head_impl.1} parent=1 // pred_region
      _
    $region21: #{_mlp_head_impl.1} parent=1 // pred_fallthru
      _
    // Predicated region
    $region22: #{_mlp_head_impl.1} parent=1 // pred_check
      _
    $region23: #{_mlp_head_impl.1} parent=1 // pred_check_branch
      %65 = sbr.rel (0) target = $region25
    $region24: #{_mlp_head_impl.1} parent=1 // pred_region
      %67 = dma.done [#allocation4], 128
    $region25: #{_mlp_head_impl.1} parent=1 // pred_fallthru
      _
    // Predicated region
    $region26: #{_mlp_head_impl.1} parent=1 // pred_check
      _
    $region27: #{_mlp_head_impl.1} parent=1 // pred_check_branch
      %69 = sbr.rel (0) target = $region29
    $region28: #{_mlp_head_impl.1} parent=1 // pred_region
      %71 = dma.done [#allocation7], 256
    $region29: #{_mlp_head_impl.1} parent=1 // pred_fallthru
      _
    // Predicated region
    $region30: #{_mlp_head_impl.1} parent=1 // pred_check
      _
    $region31: #{_mlp_head_impl.1} parent=1 // pred_check_branch
      %73 = sbr.rel (0) target = $region33
    $region32: #{_mlp_head_impl.1} parent=1 // pred_region
      %75 = dma.done [#allocation7], 64
    $region33: #{_mlp_head_impl.1} parent=1 // pred_fallthru
      _
    // Predicated region
    $region34: #{_mlp_head_impl.1} parent=1 // pred_check
      _
    $region35: #{_mlp_head_impl.1} parent=1 // pred_check_branch
      %77 = sbr.rel (0) target = $region37
    $region36: #{_mlp_head_impl.1} parent=1 // pred_region
      %79 = dma.done [#allocation10], 512
    $region37: #{_mlp_head_impl.1} parent=1 // pred_fallthru
      _
    %p81 = scmp.eq.s32.totalorder 0, 0
    // Predicated region
    $region38: #{_mlp_head_impl.1} parent=1 // pred_check
      %p82 = pneg %p81
    $region39: #{_mlp_head_impl.1} parent=1 // pred_check_branch
      %84 = sbr.rel (%p82) target = $region41
    $region40: #{_mlp_head_impl.1} parent=1 // pred_region
      %v85 = vld [vmem:[#allocation6] sm:$0xf]
      %v86 = vld [vmem:[#allocation6 + $0x4] sm:$0xf]
      %v87 = vld [vmem:[#allocation6 + $0x8] sm:$0xf]
      %v88 = vld [vmem:[#allocation6 + $0xc] sm:$0xf]
      %v89 = vld [vmem:[#allocation8] sm:$0x7]
      %v90 = vld [vmem:[#allocation3] sm:$0xff]
      %v91 = vpack.c.bf16 %v90, %v90
      %v92 = vperm.slane %v89, 0
      %v97 = vunpack.c.l.b16 %v85
      %v98 = vunpack.c.l.b16 %v86
      %v99 = vunpack.c.l.b16 %v87
      %v100 = vunpack.c.l.b16 %v88
      %v101 = vpack.c.b16 %v98, %v97
      %v102 = vpack.c.b16 %v100, %v99
      %vm105 = vcmask 261120
      %v107 = vsel %vm105, %v91, 0
      %109 = vmatpush.bf16.msra.mxu0 0
      %110 = vmatpush.bf16.msra.mxu0 0
      %111 = vmatpush.bf16.msra.mxu0 0
      %112 = vmatpush.bf16.msra.mxu0 0
      %113 = vmatpush.bf16.msra.mxu0 0
      %114 = vmatpush.bf16.msra.mxu0 0
      %115 = vmatpush.bf16.msra.mxu0 %v102
      %116 = vmatpush.bf16.msra.mxu0 %v101
      %117 = vmatmul.bf16.gmra.mxu0 %v107
      %v118 = vpop.f32.mrf.mxu0
      %v119 = vadd.f32 %v92, %v118
      %v120 = vpop.f32.mrf.mxu0
      %121 = vdwg.mxu0
      %v122 = vmul.f32 %v119, 0.5
      %v123 = vmul.f32 %v119, 0.70710677
      %v124 = vmul.f32 %v123, %v123
      %v125 = vmin.f32 16.0, %v124
      %v126 = vmul.f32 %v125, 2.1237322e-06
      %v127 = vadd.f32 %v126, 0.00028619796
      %v128 = vmul.f32 %v125, %v127
      %v129 = vadd.f32 %v128, 0.0036580483
      %v130 = vmul.f32 %v125, %v129
      %v131 = vadd.f32 %v130, 0.05243302
      %v132 = vmul.f32 %v125, %v131
      %v133 = vadd.f32 %v132, 0.18741608
      %v134 = vmul.f32 %v125, %v133
      %v135 = vadd.f32 %v134, 1.1283791
      %v136 = vmul.f32 %v123, %v135
      %v137 = vmul.f32 %v125, 3.8918573e-05
      %v138 = vadd.f32 %v137, 0.001143296
      %v139 = vmul.f32 %v125, %v138
      %v140 = vadd.f32 %v139, 0.014752088
      %v141 = vmul.f32 %v125, %v140
      %v142 = vadd.f32 %v141, 0.112945676
      %v143 = vmul.f32 %v125, %v142
      %v144 = vadd.f32 %v143, 0.4994258
      %v145 = vmul.f32 %v125, %v144
      %v146 = vadd.f32 %v145, 1.0
      %v147 = vrcp.pop %v146
      %v148 = vmul.f32 %v146, %v147
      %v149 = vsub.f32 1.0, %v148
      %v150 = vmul.f32 %v147, %v149
      %v151 = vadd.f32 %v147, %v150
      %vm152 = vweird.f32 %v146
      %vm153 = vweird.f32 %v147
      %vm154 = vmor %vm152, %vm153
      %v155 = vsel %vm154, %v147, %v151
      %v156 = vand.u32 2147483647, %v146
      %vm157 = vcmp.eq.f32.partialorder %v156, 8.507059e+37
      %v158 = vand.u32 %v146, 2147483648
      %v159 = vor.u32 1.1754944e-38, %v158
      %v160 = vsel %vm157, %v159, %v155
      %v161 = vmul.f32 %v136, %v160
      %v162 = vmin.f32 %v161, 1.0
      %v163 = vmax.f32 %v162, -1.0
      %v164 = vadd.f32 %v163, 1.0
      %v165 = vmul.f32 %v122, %v164
      %vm166 = vcmask 523264
      %v167 = vsel %vm166, %v165, 0.0
      %168 = vadd.xlane.f32.xlu0 %v167
      %v169 = vpop.xlane.xlu0 %168
      %v170 = vmul.f32 %v165, %v165
      %v171 = vsel %vm166, %v170, 0.0
      %172 = vadd.xlane.f32.xlu0 %v171
      %v173 = vpop.xlane.xlu0 %172
      %v174 = vmul.f32 %v169, 0.015625
      %v175 = vmul.f32 %v173, 0.015625
      %v176 = vmul.f32 %v174, %v174
      %v177 = vsub.f32 %v175, %v176
      %v178 = vmax.f32 %v177, 0.0
      %v179 = vsub.f32 %v165, %v174
      %v180 = vadd.f32 %v178, 1e-05
      %v181 = vrsqrt.pop %v180
      %v182 = vmul.f32 %v181, %v180
      %v183 = vmul.f32 %v182, %v181
      %v184 = vmul.f32 0.5, %v183
      %v185 = vsub.f32 1.5, %v184
      %v186 = vmul.f32 %v181, %v185
      %vm187 = vweird.f32 %v180
      %vm188 = vweird.f32 %v181
      %vm189 = vmor %vm187, %vm188
      %v190 = vsel %vm189, %v181, %v186
      %v191 = vmul.f32 %v179, %v190
      %v192 = vperm.slane %v89, 1
      %v193 = vmul.f32 %v191, %v192
      %v194 = vperm.slane %v89, 2
      %v195 = vadd.f32 %v193, %v194
      %v196 = vpack.c.bf16 %v195, %v195
      %vm197 = vcmask 519168
      %198 = vst.msk [vmem:[#allocation2] sm:$0xf] %vm197, %v196
    $region41: #{_mlp_head_impl.1} parent=1 // pred_fallthru
      _
    %v199 = vld [vmem:[#allocation9] sm:$0xf]
    %v200 = vld [vmem:[#allocation9 + $0x4] sm:$0xf]
    %v201 = vld [vmem:[#allocation9 + $0x8] sm:$0xf]
    %v202 = vld [vmem:[#allocation9 + $0xc] sm:$0xf]
    %v203 = vld [vmem:[#allocation9 + $0x10] sm:$0xf]
    %v204 = vld [vmem:[#allocation9 + $0x14] sm:$0xf]
    %v205 = vld [vmem:[#allocation9 + $0x18] sm:$0xf]
    %v206 = vld [vmem:[#allocation9 + $0x1c] sm:$0xf]
    %v207 = vld [vmem:[%s4] sm:$0x1]
    %v208 = vld [vmem:[#allocation2] sm:$0xf]
    %v210 = vperm.slane %v207, 0
    %v220 = vunpack.c.l.b16 %v199
    %v221 = vunpack.c.l.b16 %v200
    %v222 = vunpack.c.l.b16 %v201
    %v223 = vunpack.c.l.b16 %v202
    %v224 = vunpack.c.l.b16 %v203
    %v225 = vunpack.c.l.b16 %v204
    %v226 = vunpack.c.l.b16 %v205
    %v227 = vunpack.c.l.b16 %v206
    %v228 = vpack.c.b16 %v221, %v220
    %v229 = vpack.c.b16 %v223, %v222
    %v230 = vpack.c.b16 %v225, %v224
    %v231 = vpack.c.b16 %v227, %v226
    %vm236 = vcmask 523264
    %v238 = vsel %vm236, %v208, 0
    %240 = vmatpush.bf16.msra.mxu0 0
    %241 = vmatpush.bf16.msra.mxu0 0
    %242 = vmatpush.bf16.msra.mxu0 0
    %243 = vmatpush.bf16.msra.mxu0 0
    %244 = vmatpush.bf16.msra.mxu0 %v231
    %245 = vmatpush.bf16.msra.mxu0 %v230
    %246 = vmatpush.bf16.msra.mxu0 %v229
    %247 = vmatpush.bf16.msra.mxu0 %v228
    %248 = vmatmul.bf16.gmra.mxu0 %v238
    %v249 = vpop.f32.mrf.mxu0
    %v250 = vadd.f32 %v210, %v249
    %v251 = vpop.f32.mrf.mxu0
    %252 = vdwg.mxu0
    %253 = vst [vmem:[#allocation11] sm:$0xff] %v250
    // Predicated region
    $region42: #{_mlp_head_impl.1} parent=1 // pred_check
      _
    $region43: #{_mlp_head_impl.1} parent=1 // pred_check_branch
      %255 = sbr.rel (0) target = $region45
    $region44: #{_mlp_head_impl.1} parent=1 // pred_region
      %257 = vsyncadd [#allocation5], 0
      %s259 = sshll.u32 [#allocation11], 4
      %s260 = int_to_ptr.vmem [resolvable:$true] %s259
      %s261 = sshll.u32 %s5, 4
      %s262 = int_to_ptr.hbm [resolvable:$true] %s261
      %264 = dma.vmem_to_hbm [thread:$0]  %s260, 128, %s262, [#allocation5]
    $region45: #{_mlp_head_impl.1} parent=1 // pred_fallthru
      _
    // Predicated region
    $region46: #{_mlp_head_impl.1} parent=1 // pred_check
      _
    $region47: #{_mlp_head_impl.1} parent=1 // pred_check_branch
      %266 = sbr.rel (0) target = $region49
    $region48: #{_mlp_head_impl.1} parent=1 // pred_region
      %268 = dma.done [#allocation5], 128
    $region49: #{_mlp_head_impl.1} parent=1 // pred_fallthru
      _
    %269 = vsyncpa [#allocation4], 1
    %270 = vsyncpa [#allocation7], 1
    %271 = vsyncpa [#allocation10], 1
    %272 = vsyncpa [#allocation5], 1

</llo_original>
